<compile_context>
chip_gen: v7x
topology: tpu7x:2x2x1
jax: 0.10.0
libtpu: 0.0.40
codegen_flags: <defaults>
</compile_context>

<pallas_src>
import functools

import jax
import jax.numpy as jnp
import numpy as np
from jax import lax
from jax.experimental import pallas as pl
from jax.experimental.pallas import tpu as pltpu

_VMEM_LIMIT = 32 * 1024 * 1024  # fits scoped-VMEM budgets on v5e / v6e / v7x


# --------------------------------------------------------------------------- #
# helpers
# --------------------------------------------------------------------------- #
def _round_up(x, m):
    return ((x + m - 1) // m) * m


def _row_tile(ho, cap=4):
    """Largest divisor of ho that is <= cap (output rows per grid step)."""
    for t in range(min(cap, ho), 0, -1):
        if ho % t == 0:
            return t
    return 1


def _sb(scale, bias_pre, bias_post):
    return jnp.stack([jnp.asarray(scale, jnp.float32),
                      jnp.asarray(bias_pre, jnp.float32),
                      jnp.asarray(bias_post, jnp.float32)])


# --------------------------------------------------------------------------- #
# Pallas kernels
# --------------------------------------------------------------------------- #
def _conv_rows_kernel(x_ref, w_ref, sb_ref, *rest, kh, kw, th, wo, relu, fuse_id):
    """Direct stride-1 conv on a VMEM-resident padded image.

    x_ref : (1, Hp, Wp, C)   whole padded image of one sample (bf16, fetched 1x/sample)
    w_ref : (kh*kw, C, O)    one (C, O) weight slab per tap (bf16, resident)
    sb_ref: (3,) f32 SMEM    [scale, pre-ReLU bias, post-ReLU bias]
    rest  : ([id_ref], o_ref) optional fused residual + output block (1, th, wo, O)
    epilogue: out = relu(acc*scale + bias_pre [+ identity]) + bias_post
    """
    if fuse_id:
        id_ref, o_ref = rest
    else:
        (o_ref,) = rest
    n_out = o_ref.shape[-1]
    row0 = pl.program_id(1) * th
    for t in range(th):
        rows = x_ref[0, pl.ds(row0 + t, kh)]                 # (kh, Wp, C)
        acc = jnp.zeros((wo, n_out), jnp.float32)
        for di in range(kh):
            for dj in range(kw):
                acc = acc + jnp.dot(rows[di, dj:dj + wo, :],
                                    w_ref[di * kw + dj],
                                    preferred_element_type=jnp.float32)
        res = acc * sb_ref[0] + sb_ref[1]
        if fuse_id:
            res = res + id_ref[0, t].astype(jnp.float32)
        if relu:
            res = jnp.maximum(res, 0.0)
        res = res + sb_ref[2]
        o_ref[0, t] = res.astype(o_ref.dtype)


def _matmul_fused_kernel(x_ref, w_ref, sb_ref, o_ref, *, relu):
    # x_ref: (TM, K) bf16, w_ref: (K, O) bf16 (resident), sb_ref: (3,) f32 SMEM
    acc = jnp.dot(x_ref[...], w_ref[...], preferred_element_type=jnp.float32)
    res = acc * sb_ref[0] + sb_ref[1]
    if relu:
        res = jnp.maximum(res, 0.0)
    res = res + sb_ref[2]
    o_ref[...] = res.astype(o_ref.dtype)


def _maxpool_kernel(x_ref, o_ref, *, th, wo2):
    # 3x3 stride-2 max over a VMEM-resident padded image (input >= 0, zero pad ok).
    # Emits the stride-1 column max (width wo2 = 2*WO); wrapper keeps every 2nd col.
    row0 = pl.program_id(1) * th
    for t in range(th):
        rows = x_ref[0, pl.ds(2 * (row0 + t), 3)]            # (3, Wp, C)
        cmax = jnp.maximum(jnp.maximum(rows[0], rows[1]), rows[2])
        m = jnp.maximum(jnp.maximum(cmax[0:wo2, :], cmax[1:wo2 + 1, :]),
                        cmax[2:wo2 + 2, :])
        o_ref[0, t] = m.astype(o_ref.dtype)


def _head_kernel(x_ref, w_ref, b_ref, sb_ref, o_ref):
    # fused global-avgpool + bias2 + fc
    pooled = jnp.mean(x_ref[...].astype(jnp.float32), axis=1) + sb_ref[0]
    o_ref[...] = (jnp.dot(pooled, w_ref[...], preferred_element_type=jnp.float32)
                  + b_ref[...])


# --------------------------------------------------------------------------- #
# Pallas wrappers
# --------------------------------------------------------------------------- #
def conv3x3_s1(x, w9, scale, bias_pre, bias_post, relu=True, identity=None):
    """Stride-1 3x3 conv, fused epilogue, no im2col materialization."""
    n, h, w, c = x.shape
    o = w9.shape[-1]
    xp = jnp.pad(x, ((0, 0), (1, 1), (1, 1), (0, 0)))
    ho, wo = h, w
    th = _row_tile(ho)
    kernel = functools.partial(_conv_rows_kernel, kh=3, kw=3, th=th, wo=wo,
                               relu=relu, fuse_id=identity is not None)
    in_specs = [
        pl.BlockSpec((1, h + 2, w + 2, c), lambda nn, hh: (nn, 0, 0, 0)),
        pl.BlockSpec((9, c, o), lambda nn, hh: (0, 0, 0)),
        pl.BlockSpec(memory_space=pltpu.SMEM),
    ]
    args = [xp, w9, _sb(scale, bias_pre, bias_post)]
    if identity is not None:
        in_specs.append(pl.BlockSpec((1, th, wo, o), lambda nn, hh: (nn, hh, 0, 0)))
        args.append(identity)
    return pl.pallas_call(
        kernel,
        out_shape=jax.ShapeDtypeStruct((n, ho, wo, o), jnp.bfloat16),
        grid=(n, ho // th),
        in_specs=in_specs,
        out_specs=pl.BlockSpec((1, th, wo, o), lambda nn, hh: (nn, hh, 0, 0)),
        compiler_params=pltpu.CompilerParams(
            dimension_semantics=("parallel", "parallel"),
            vmem_limit_bytes=_VMEM_LIMIT),
    )(*args)


def matmul_fused(x, w, scale, bias_pre, bias_post, relu, out_dtype=jnp.bfloat16):
    """out = relu(x @ w * scale + bias_pre) + bias_post ; M-adaptive row tiles."""
    m, k = x.shape
    o = w.shape[1]
    tm = min(128, _round_up(m, 8))        # don't pad tiny M to 128
    m_pad = _round_up(m, tm)
    if m_pad != m:
        x = jnp.pad(x, ((0, m_pad - m), (0, 0)))
    out = pl.pallas_call(
        functools.partial(_matmul_fused_kernel, relu=relu),
        out_shape=jax.ShapeDtypeStruct((m_pad, o), out_dtype),
        grid=(m_pad // tm,),
        in_specs=[pl.BlockSpec((tm, k), lambda i: (i, 0)),
                  pl.BlockSpec((k, o), lambda i: (0, 0)),
                  pl.BlockSpec(memory_space=pltpu.SMEM)],
        out_specs=pl.BlockSpec((tm, o), lambda i: (i, 0)),
        compiler_params=pltpu.CompilerParams(
            dimension_semantics=("parallel",),
            vmem_limit_bytes=_VMEM_LIMIT),
    )(x, w, _sb(scale, bias_pre, bias_post))
    return out[:m] if m_pad != m else out


def conv_im2col(x, wmat, kh, kw, stride, pad, scale, bias_pre, bias_post, relu):
    """im2col + fused matmul. Used only for the 7x7 stem and the stride-2 convs,
    where the patch matrix is small (<= 2.25x the input activation)."""
    n, h, w, c = x.shape
    o = wmat.shape[1]
    xp = jnp.pad(x, ((0, 0), (pad, pad), (pad, pad), (0, 0)))
    ho = (h + 2 * pad - kh) // stride + 1
    wo = (w + 2 * pad - kw) // stride + 1
    slabs = []
    for i in range(kh):
        for j in range(kw):
            slabs.append(xp[:, i:i + stride * (ho - 1) + 1:stride,
                            j:j + stride * (wo - 1) + 1:stride, :])
    patches = jnp.concatenate(slabs, axis=-1).reshape(n * ho * wo, kh * kw * c)
    k_total = wmat.shape[0]
    if k_total > kh * kw * c:             # K padded up to a multiple of 128 (stem)
        patches = jnp.pad(patches, ((0, 0), (0, k_total - kh * kw * c)))
    out = matmul_fused(patches, wmat, scale, bias_pre, bias_post, relu)
    return out.reshape(n, ho, wo, o)


def conv1x1_s2(x, wmat):
    """1x1 stride-2 downsample: strided subsample (XLA) + fused matmul."""
    xs = x[:, ::2, ::2, :]
    n, ho, wo, c = xs.shape
    out = matmul_fused(xs.reshape(n * ho * wo, c), wmat, 1.0, 0.0, 0.0, relu=False)
    return out.reshape(n, ho, wo, wmat.shape[1])


def maxpool_3x3_s2_p1(x):
    """3x3/s2/p1 maxpool; whole padded image resident in VMEM, no (9,M,C) stack.
    Zero padding is valid because the input is post-ReLU (>= 0)."""
    n, h, w, c = x.shape
    ho = (h + 2 - 3) // 2 + 1
    wo = (w + 2 - 3) // 2 + 1
    wo2 = 2 * wo
    extra_w = max(0, wo2 + 2 - (w + 2))
    xp = jnp.pad(x, ((0, 0), (1, 1), (1, 1 + extra_w), (0, 0)))
    th = _row_tile(ho)
    out = pl.pallas_call(
        functools.partial(_maxpool_kernel, th=th, wo2=wo2),
        out_shape=jax.ShapeDtypeStruct((n, ho, wo2, c), jnp.bfloat16),
        grid=(n, ho // th),
        in_specs=[pl.BlockSpec((1, h + 2, w + 2 + extra_w, c),
                               lambda nn, hh: (nn, 0, 0, 0))],
        out_specs=pl.BlockSpec((1, th, wo2, c), lambda nn, hh: (nn, hh, 0, 0)),
        compiler_params=pltpu.CompilerParams(
            dimension_semantics=("parallel", "parallel"),
            vmem_limit_bytes=_VMEM_LIMIT),
    )(xp)
    return out[:, :, 0:wo2:2, :]


def head(x, fc_w, fc_b, bias2):
    """Fused global-avgpool + bias2 + fc."""
    n, h, w, c = x.shape
    nc = fc_w.shape[1]
    xr = x.reshape(n, h * w, c)
    return pl.pallas_call(
        _head_kernel,
        out_shape=jax.ShapeDtypeStruct((n, nc), jnp.float32),
        grid=(1,),
        in_specs=[pl.BlockSpec((n, h * w, c), lambda i: (0, 0, 0)),
                  pl.BlockSpec((c, nc), lambda i: (0, 0)),
                  pl.BlockSpec((1, nc), lambda i: (0, 0)),
                  pl.BlockSpec(memory_space=pltpu.SMEM)],
        out_specs=pl.BlockSpec((n, nc), lambda i: (0, 0)),
        compiler_params=pltpu.CompilerParams(
            dimension_semantics=("arbitrary",),
            vmem_limit_bytes=_VMEM_LIMIT),
    )(xr, fc_w, fc_b.reshape(1, nc), jnp.asarray(bias2, jnp.float32).reshape(1))


# --------------------------------------------------------------------------- #
# FixupResNet forward (BasicBlock)
# --------------------------------------------------------------------------- #
def fixup_basic_block(x, blk, bias1a_folded, post_bias):
    has_ds = "ds_wmat" in blk
    xb = x if bias1a_folded else x + blk["bias1a"].astype(jnp.bfloat16)
    identity = conv1x1_s2(xb, blk["ds_wmat"]) if has_ds else x
    if blk["stride"] == 1:
        # relu(conv1(xb) + bias1b) + bias2a   (bias2a folded post-ReLU)
        out1 = conv3x3_s1(xb, blk["conv1_w9"], 1.0, blk["bias1b"], blk["bias2a"],
                          relu=True)
    else:
        out1 = conv_im2col(xb, blk["conv1_wmat"], 3, 3, blk["stride"], 1,
                           1.0, blk["bias1b"], blk["bias2a"], relu=True)
    # relu(conv2(out1)*scale + bias2b + identity) + (next block's bias1a, maybe)
    return conv3x3_s1(out1, blk["conv2_w9"], blk["scale"], blk["bias2b"], post_bias,
                      relu=True, identity=identity)


def fixup_resnet_forward(prep, x_nchw):
    x = jnp.transpose(x_nchw, (0, 2, 3, 1)).astype(jnp.bfloat16)   # NCHW -> NHWC
    x = conv_im2col(x, prep["conv1_wmat"], 7, 7, 2, 3,
                    1.0, prep["bias1"], 0.0, relu=True)            # stem + relu
    x = maxpool_3x3_s2_p1(x)
    blocks = prep["blocks"]
    for i, blk in enumerate(blocks):
        # bias1a of block i is folded into block i-1's epilogue only when block i
        # has a downsample (then the un-biased activation is never needed again).
        folded = ("ds_wmat" in blk) and i > 0
        nxt = blocks[i + 1] if i + 1 < len(blocks) else None
        post = nxt["bias1a"] if (nxt is not None and "ds_wmat" in nxt) else 0.0
        x = fixup_basic_block(x, blk, folded, post)
    return head(x, prep["fc_wmat"], prep["fc_b"], prep["bias2"])


# --------------------------------------------------------------------------- #
# Parameters: original (PyTorch-layout, f32) + one-time kernel-layout prep.
# TODO(synk): Fixup zero-initializes conv2 / fc weights; small random values are
#             used instead so the kernels are exercised with non-trivial data.
# --------------------------------------------------------------------------- #
def init_params(key, layers=(1, 1, 1, 1), num_classes=10):
    keys = iter(jax.random.split(key, 64))

    def nk():
        return next(keys)

    def conv_w(o, i, kh, kw, gain=2.0, extra=1.0):
        std = float(np.sqrt(gain / (i * kh * kw))) * extra
        return std * jax.random.normal(nk(), (o, i, kh, kw), jnp.float32)

    def sbias(v):
        return jnp.asarray(v, jnp.float32)

    num_layers = sum(layers)
    fixup1 = num_layers ** (-1.0 / 1.5)

    params = {
        "conv1_w": conv_w(64, 3, 7, 7),
        "bias1": sbias(0.02),
        "bias2": sbias(-0.01),
        "fc_w": float(np.sqrt(1.0 / 512.0))
        * jax.random.normal(nk(), (num_classes, 512), jnp.float32),
        "fc_b": 0.01 * jax.random.normal(nk(), (num_classes,), jnp.float32),
        "blocks": [],
    }

    inplanes = 64
    cfg = [(64, 1, layers[0]), (128, 2, layers[1]),
           (256, 2, layers[2]), (512, 2, layers[3])]
    for planes, stride, nblocks in cfg:
        for b in range(nblocks):
            s = stride if b == 0 else 1
            blk = {
                "stride": s,
                "bias1a": sbias(0.01),
                "bias1b": sbias(-0.02),
                "bias2a": sbias(0.015),
                "bias2b": sbias(-0.005),
                "scale": sbias(1.0),
                "conv1_w": conv_w(planes, inplanes, 3, 3, gain=2.0, extra=fixup1),
                "conv2_w": conv_w(planes, planes, 3, 3, gain=0.05),
            }
            if s != 1 or inplanes != planes:
                blk["ds_w"] = conv_w(planes, inplanes, 1, 1, gain=1.0)
            params["blocks"].append(blk)
            inplanes = planes
    return params


def prepare_params(params):
    """One-time: transpose / reshape / pad / cast weights to kernel layouts
    (hoisted out of the forward pass)."""
    def w9(w):       # (O, C, 3, 3) -> (9, C, O) bf16
        o, c = w.shape[0], w.shape[1]
        return jnp.transpose(w, (2, 3, 1, 0)).reshape(9, c, o).astype(jnp.bfloat16)

    def wmat(w, k_pad=None):   # (O, C, kh, kw) -> (kh*kw*C [padded], O) bf16
        o, c, kh, kw = w.shape
        m = jnp.transpose(w, (2, 3, 1, 0)).reshape(kh * kw * c, o)
        if k_pad is not None and k_pad > kh * kw * c:
            m = jnp.pad(m, ((0, k_pad - kh * kw * c), (0, 0)))
        return m.astype(jnp.bfloat16)

    prep = {
        "conv1_wmat": wmat(params["conv1_w"], k_pad=_round_up(7 * 7 * 3, 128)),
        "bias1": params["bias1"],
        "bias2": params["bias2"],
        "fc_wmat": params["fc_w"].T.astype(jnp.float32),
        "fc_b": params["fc_b"].astype(jnp.float32),
        "blocks": [],
    }
    for blk in params["blocks"]:
        b = {
            "stride": blk["stride"],
            "bias1a": blk["bias1a"], "bias1b": blk["bias1b"],
            "bias2a": blk["bias2a"], "bias2b": blk["bias2b"],
            "scale": blk["scale"],
            "conv2_w9": w9(blk["conv2_w"]),
        }
        if blk["stride"] == 1:
            b["conv1_w9"] = w9(blk["conv1_w"])
        else:
            b["conv1_wmat"] = wmat(blk["conv1_w"])
        if "ds_w" in blk:
            b["ds_wmat"] = wmat(blk["ds_w"])
        prep["blocks"].append(b)
    return prep


# --------------------------------------------------------------------------- #
# Pure-JAX f32 reference (correctness check)
# --------------------------------------------------------------------------- #
def reference_forward(params, x_nchw):
    x = jnp.transpose(x_nchw, (0, 2, 3, 1)).astype(jnp.float32)

    def conv(xx, w, stride, pad):
        w_hwio = jnp.transpose(w, (2, 3, 1, 0))
        return lax.conv_general_dilated(
            xx, w_hwio, (stride, stride), [(pad, pad), (pad, pad)],
            dimension_numbers=("NHWC", "HWIO", "NHWC"),
        )

    x = jnp.maximum(conv(x, params["conv1_w"], 2, 3) + params["bias1"], 0.0)
    x = lax.reduce_window(
        x, -jnp.inf, lax.max, (1, 3, 3, 1), (1, 2, 2, 1),
        [(0, 0), (1, 1), (1, 1), (0, 0)],
    )
    for p in params["blocks"]:
        identity = x
        xb = x + p["bias1a"]
        out = jnp.maximum(conv(xb, p["conv1_w"], p["stride"], 1) + p["bias1b"], 0.0)
        out = conv(out + p["bias2a"], p["conv2_w"], 1, 1) * p["scale"] + p["bias2b"]
        if "ds_w" in p:
            identity = conv(xb, p["ds_w"], p["stride"], 0)
        x = jnp.maximum(out + identity, 0.0)
    x = jnp.mean(x, axis=(1, 2)) + params["bias2"]
    return x @ params["fc_w"].T + params["fc_b"]


# --------------------------------------------------------------------------- #
if __name__ == "__main__":
    key = jax.random.PRNGKey(0)
    kp, kx = jax.random.split(key)
    params = init_params(kp, layers=(1, 1, 1, 1), num_classes=10)
    prep = prepare_params(params)

    # batch=2, 3 channels, 32x32 spatial (NCHW, PyTorch convention)
    x = jax.random.normal(kx, (2, 3, 32, 32), jnp.float32)

    out = jax.block_until_ready(fixup_resnet_forward(prep, x))
    ref = jax.block_until_ready(reference_forward(params, x))

    # bf16 activations/weights -> loosened tolerance vs the f32 reference.
    np.testing.assert_allclose(np.asarray(out), np.asarray(ref), rtol=1e-1, atol=1e-1)

    assert out.shape == (2, 10)
    print("KERNEL_OK")
</pallas_src>

<mosaic_0001>
module attributes {stable_mosaic.version = 11 : i64} {
  func.func @_matmul_fused_kernel(%arg0: i32, %arg1: memref<128x256xbf16, #tpu.memory_space<vmem>>, %arg2: memref<256x64xbf16, #tpu.memory_space<vmem>>, %arg3: memref<3xf32, #tpu.memory_space<smem>>, %arg4: memref<128x64xbf16, #tpu.memory_space<vmem>>) attributes {dimension_semantics = [#tpu.dimension_semantics<parallel>], iteration_bounds = array<i64: 4>, scalar_prefetch = 0 : i64, scratch_operands = 0 : i64, tpu.core_type = #tpu.core_type<tc>, window_params = [{transform_indices = @transform_0, window_bounds = array<i64: 128, 256>}, {pipeline_mode = #tpu.pipeline_mode<synchronous>, transform_indices = @transform_1, window_bounds = array<i64: 256, 64>}, {transform_indices = @transform_2, window_bounds = array<i64: 3>}, {transform_indices = @transform_3, window_bounds = array<i64: 128, 64>}]} {
    %c0 = arith.constant 0 : index
    %c0_0 = arith.constant 0 : index
    %0 = vector.load %arg1[%c0, %c0_0] : memref<128x256xbf16, #tpu.memory_space<vmem>>, vector<128x256xbf16>
    %c0_1 = arith.constant 0 : index
    %c0_2 = arith.constant 0 : index
    %1 = vector.load %arg2[%c0_1, %c0_2] : memref<256x64xbf16, #tpu.memory_space<vmem>>, vector<256x64xbf16>
    %cst = arith.constant dense<0.000000e+00> : vector<128x64xf32>
    %2 = tpu.matmul %0, %1, %cst {dimension_numbers = #tpu.dot_dimension_numbers<[1], [0], [0], [1], [0, 0, 1, 1], [], []>} : vector<128x256xbf16>, vector<256x64xbf16>, vector<128x64xf32> -> vector<128x64xf32>
    %c0_3 = arith.constant 0 : index
    %3 = memref.load %arg3[%c0_3] : memref<3xf32, #tpu.memory_space<smem>>
    %4 = vector.broadcast %3 : f32 to vector<128x64xf32>
    %5 = arith.mulf %2, %4 : vector<128x64xf32>
    %c1 = arith.constant 1 : index
    %6 = memref.load %arg3[%c1] : memref<3xf32, #tpu.memory_space<smem>>
    %7 = vector.broadcast %6 : f32 to vector<128x64xf32>
    %8 = arith.addf %5, %7 : vector<128x64xf32>
    %cst_4 = arith.constant 0.000000e+00 : f32
    %9 = vector.broadcast %cst_4 : f32 to vector<128x64xf32>
    %10 = arith.maximumf %8, %9 : vector<128x64xf32>
    %c2 = arith.constant 2 : index
    %11 = memref.load %arg3[%c2] : memref<3xf32, #tpu.memory_space<smem>>
    %12 = vector.broadcast %11 : f32 to vector<128x64xf32>
    %13 = arith.addf %10, %12 : vector<128x64xf32>
    %14 = arith.truncf %13 : vector<128x64xf32> to vector<128x64xbf16>
    %c0_5 = arith.constant 0 : index
    %c0_6 = arith.constant 0 : index
    %15 = vector.load %arg4[%c0_5, %c0_6] : memref<128x64xbf16, #tpu.memory_space<vmem>>, vector<128x64xbf16>
    tpu.vector_store %arg4[%c0_5, %c0_6], %14 {strides = array<i32>} : memref<128x64xbf16, #tpu.memory_space<vmem>>, vector<128x64xbf16>,
    return
  }
  func.func @transform_0(%arg0: i32) -> (i32, i32) {
    %c0_i32 = arith.constant 0 : i32
    %c0_i32_0 = arith.constant 0 : i32
    return %arg0, %c0_i32 : i32, i32
  }
  func.func @transform_1(%arg0: i32) -> (i32, i32) {
    %c0_i32 = arith.constant 0 : i32
    %c0_i32_0 = arith.constant 0 : i32
    %c0_i32_1 = arith.constant 0 : i32
    return %c0_i32, %c0_i32_0 : i32, i32
  }
  func.func @transform_2(%arg0: i32) -> i32 {
    %c0_i32 = arith.constant 0 : i32
    %c0_i32_0 = arith.constant 0 : i32
    return %c0_i32 : i32
  }
  func.func @transform_3(%arg0: i32) -> (i32, i32) {
    %c0_i32 = arith.constant 0 : i32
    %c0_i32_0 = arith.constant 0 : i32
    return %arg0, %c0_i32 : i32, i32
  }
}

</mosaic_0001>

<llo_original>
// kernel: tpu_custom_call.1
$region0: #{tpu_custom_call.1}
  #allocation0 [shape = 'u32[]', space=smem, size = 0x4, offset = 0x4, fixed_abs, tag = 'smem constant byte address 0x4 - core index']
  #allocation1 [shape = 'u32[144,128]{1,0:T(1,128)}', space=vmem, size = 0x12000, scoped, tag = 'internal scratch']
  %s0 = inlined_call_operand.hbm [shape: bf16[512,256], index: 0, kind: input, shape index: {}]
  %s1 = inlined_call_operand.vmem [shape: bf16[256,64], index: 1, kind: input, shape index: {}]
  %s2 = inlined_call_operand.vmem [shape: f32[3], index: 2, kind: input, shape index: {}]
  %s3 = inlined_call_operand.vmem [shape: bf16[512,64], index: 3, kind: output, shape index: {}]
  %s4 = sld [smem:[#allocation0]]
  $region53: #{tpu_custom_call.1} parent=0
    _
  %s6 = ssub.s32 1, %s4
  %s7 = scalar_select 0, %s6, %s4
  $region1: #{tpu_custom_call.1} parent=0
    #allocation2 [shape = 'u8[131072]{0}', space=vmem, size = 0x20000, scoped, tag = 'input window, operand 0']
    #allocation3 [shape = 's32[2]{0}', space=sflag, size = 0x8, scoped, tag = 'scoped memory for tpu_custom_call.1']
    #allocation4 [shape = 's32[2]{0}', space=sflag, size = 0x8, scoped, tag = 'scoped memory for tpu_custom_call.1']
    #allocation5 [shape = 'u8[512]{0}', space=smem, size = 0x200, scoped, tag = 'input window, operand 2, single buffered']
    %8 = vsyncpa [#allocation3], 0
    %s9 = scalar_lea.sflag [#allocation3], 1
    %10 = vsyncpa %s9, 0
    %11 = vsyncpa [#allocation4], 0
    loop: start=0, step=1, limit=6
    $region2: #{tpu_custom_call.1} parent=1 // loop_pre_header
      _
    $region3: #{tpu_custom_call.1} parent=1 // loop_header
      %s13 = sphi 0, %s17
      %p14 = scmp.ge.s32.totalorder %s13, 6
      %s23 = sphi 0, %s25
      %s26 = sphi 0, %s23
      %s27 = sphi 0, %s26
      %s43 = sphi 0, %s27
      %s47 = sphi 0, %s47
      %s49 = sphi 0, %s47
      %s50 = sphi 0, %s49
      %s64 = sphi 0, %s50
      %s68 = sphi 0, %s68
      %s70 = sphi 0, %s68
      %s71 = sphi 0, %s70
      %s85 = sphi 0, %s71
      %s91 = sphi 0, %s93
      %s94 = sphi 0, %s91
      %s95 = sphi 0, %s94
      %s111 = sphi 0, %s95
    $region4: #{tpu_custom_call.1} parent=1 // loop_header_branch
      %16 = sbr.rel (%p14) target = $region8
    $region5: #{tpu_custom_call.1} parent=1 // loop_body
      %s18 = ssub.s32 %s13, 1
      %s19 = ssub.s32 %s13, 2
      %s20 = sadd.s32 %s13, 1
      %s21 = ssub.s32 %s13, %s20
      %p22 = scmp.eq.s32.totalorder %s21, 0
      %s24 = sadd.s32 %s23, 1
      %s25 = scalar_select %p22, %s23, %s24
      %p28 = pneg %p22
      %p29 = scmp.eq.s32.totalorder %s13, 3
      %p30 = por %p28, %p29
      %p31 = scmp.ne.s32.totalorder %s23, %s26
      %p32 = scmp.eq.s32.totalorder %s13, 0
      %p33 = por %p31, %p32
      %p34 = scmp.ne.s32.totalorder %s23, %s26
      %p35 = scmp.eq.s32.totalorder %s18, 3
      %p36 = por %p34, %p35
      %p37 = scmp.ne.s32.totalorder %s26, %s27
      %p38 = scmp.eq.s32.totalorder %s18, 0
      %p39 = por %p37, %p38
      %p40 = scmp.ne.s32.totalorder %s26, %s27
      %p41 = scmp.eq.s32.totalorder %s19, 3
      %p42 = por %p40, %p41
      %p44 = scmp.ne.s32.totalorder %s27, %s43
      %p45 = scmp.eq.s32.totalorder %s19, 0
      %p46 = por %p44, %p45
      %s48 = sadd.s32 %s47, 1
      %p51 = scmp.eq.s32.totalorder %s13, 3
      %p52 = scmp.ne.s32.totalorder %s47, %s49
      %p53 = scmp.eq.s32.totalorder %s13, 0
      %p54 = por %p52, %p53
      %p55 = scmp.ne.s32.totalorder %s47, %s49
      %p56 = scmp.eq.s32.totalorder %s18, 3
      %p57 = por %p55, %p56
      %p58 = scmp.ne.s32.totalorder %s49, %s50
      %p59 = scmp.eq.s32.totalorder %s18, 0
      %p60 = por %p58, %p59
      %p61 = scmp.ne.s32.totalorder %s49, %s50
      %p62 = scmp.eq.s32.totalorder %s19, 3
      %p63 = por %p61, %p62
      %p65 = scmp.ne.s32.totalorder %s50, %s64
      %p66 = scmp.eq.s32.totalorder %s19, 0
      %p67 = por %p65, %p66
      %s69 = sadd.s32 %s68, 1
      %p72 = scmp.eq.s32.totalorder %s13, 3
      %p73 = scmp.ne.s32.totalorder %s68, %s70
      %p74 = scmp.eq.s32.totalorder %s13, 0
      %p75 = por %p73, %p74
      %p76 = scmp.ne.s32.totalorder %s68, %s70
      %p77 = scmp.eq.s32.totalorder %s18, 3
      %p78 = por %p76, %p77
      %p79 = scmp.ne.s32.totalorder %s70, %s71
      %p80 = scmp.eq.s32.totalorder %s18, 0
      %p81 = por %p79, %p80
      %p82 = scmp.ne.s32.totalorder %s70, %s71
      %p83 = scmp.eq.s32.totalorder %s19, 3
      %p84 = por %p82, %p83
      %p86 = scmp.ne.s32.totalorder %s71, %s85
      %p87 = scmp.eq.s32.totalorder %s19, 0
      %p88 = por %p86, %p87
      %s89 = ssub.s32 %s13, %s20
      %p90 = scmp.eq.s32.totalorder %s89, 0
      %s92 = sadd.s32 %s91, 1
      %s93 = scalar_select %p90, %s91, %s92
      %p96 = pneg %p90
      %p97 = scmp.eq.s32.totalorder %s13, 3
      %p98 = por %p96, %p97
      %p99 = scmp.ne.s32.totalorder %s91, %s94
      %p100 = scmp.eq.s32.totalorder %s13, 0
      %p101 = por %p99, %p100
      %p102 = scmp.ne.s32.totalorder %s91, %s94
      %p103 = scmp.eq.s32.totalorder %s18, 3
      %p104 = por %p102, %p103
      %p105 = scmp.ne.s32.totalorder %s94, %s95
      %p106 = scmp.eq.s32.totalorder %s18, 0
      %p107 = por %p105, %p106
      %p108 = scmp.ne.s32.totalorder %s94, %s95
      %p109 = scmp.eq.s32.totalorder %s19, 3
      %p110 = por %p108, %p109
      %p112 = scmp.ne.s32.totalorder %s95, %s111
      %p113 = scmp.eq.s32.totalorder %s19, 0
      %p114 = por %p112, %p113
      %p115 = scmp.le.s32.totalorder 1, %s13
      %p116 = scmp.lt.s32.totalorder %s13, 5
      %p117 = pnand %p115, %p116
      %p118 = pneg %p117
      // Predicated region
      $region9: #{tpu_custom_call.1} parent=5 // pred_check
        _
      $region10: #{tpu_custom_call.1} parent=5 // pred_check_branch
        %120 = sbr.rel (%p117) target = $region12
      $region11: #{tpu_custom_call.1} parent=5 // pred_region
        %s121 = ssub.s32 %s13, 1
        // Predicated region
        $region13: #{tpu_custom_call.1} parent=11 // pred_check
          %p122 = pneg %p60
        $region14: #{tpu_custom_call.1} parent=11 // pred_check_branch
          %124 = sbr.rel (%p122) target = $region16
        $region15: #{tpu_custom_call.1} parent=11 // pred_region
          _
        $region16: #{tpu_custom_call.1} parent=11 // pred_fallthru
          _
        // Predicated region
        $region17: #{tpu_custom_call.1} parent=11 // pred_check
          %p125 = pneg %p81
        $region18: #{tpu_custom_call.1} parent=11 // pred_check_branch
          %127 = sbr.rel (%p125) target = $region20
        $region19: #{tpu_custom_call.1} parent=11 // pred_region
          %s129 = ssub.s32 16, 16
          %130 = vsyncadd [#allocation4], %s129
          %s132 = sshll.u32 %s2, 4
          %s133 = int_to_ptr.vmem [resolvable:$true] %s132
          %135 = dma.vmem_to_smem %s133, 16, [#allocation5], [#allocation4]
        $region20: #{tpu_custom_call.1} parent=11 // pred_fallthru
          _
      $region12: #{tpu_custom_call.1} parent=5 // pred_fallthru
        _
      %p136 = scmp.lt.s32.totalorder %s13, 4
      // Predicated region
      $region21: #{tpu_custom_call.1} parent=5 // pred_check
        %p137 = pneg %p136
      $region22: #{tpu_custom_call.1} parent=5 // pred_check_branch
        %139 = sbr.rel (%p137) target = $region24
      $region23: #{tpu_custom_call.1} parent=5 // pred_region
        // Predicated region
        $region25: #{tpu_custom_call.1} parent=23 // pred_check
          %p140 = pneg %p33
        $region26: #{tpu_custom_call.1} parent=23 // pred_check_branch
          %142 = sbr.rel (%p140) target = $region28
        $region27: #{tpu_custom_call.1} parent=23 // pred_region
          %s143 = sand.u32 %s23, 1
          %s144 = scalar_lea.sflag [#allocation3], %s143
          %s145 = sand.u32 %s23, 1
          %s146 = smul.addr %s145, 128
          %s147 = scalar_lea.vmem [#allocation2], %s146
          %s148 = smul.u32 16, %s13
          %s150 = ssub.s32 2048, 2048
          %151 = vsyncadd %s144, %s150
          %s152 = smul.addr %s148, 2
          %s153 = smul.addr %s152, 64
          %s154 = scalar_lea.hbm %s0, %s153
          %s155 = sshll.u32 %s147, 4
          %s156 = int_to_ptr.vmem [resolvable:$true] %s155
          %161 = dma.hbm_to_vmem [thread:$0]  %s154, 2048, %s156, %s144, 128, 128, 8
        $region28: #{tpu_custom_call.1} parent=23 // pred_fallthru
          _
      $region24: #{tpu_custom_call.1} parent=5 // pred_fallthru
        _
      %p162 = scmp.le.s32.totalorder 1, %s13
      %p163 = scmp.lt.s32.totalorder %s13, 5
      %p164 = pnand %p162, %p163
      %p165 = pneg %p164
      // Predicated region
      $region29: #{tpu_custom_call.1} parent=5 // pred_check
        _
      $region30: #{tpu_custom_call.1} parent=5 // pred_check_branch
        %167 = sbr.rel (%p164) target = $region32
      $region31: #{tpu_custom_call.1} parent=5 // pred_region
        %s168 = ssub.s32 %s13, 1
        %s169 = sand.u32 %s26, 1
        %s170 = scalar_lea.sflag [#allocation3], %s169
        %s171 = sand.u32 %s26, 1
        %s172 = smul.addr %s171, 128
        %s173 = scalar_lea.vmem [#allocation2], %s172
        // Predicated region
        $region33: #{tpu_custom_call.1} parent=31 // pred_check
          %p174 = pneg %p39
        $region34: #{tpu_custom_call.1} parent=31 // pred_check_branch
          %176 = sbr.rel (%p174) target = $region36
        $region35: #{tpu_custom_call.1} parent=31 // pred_region
          %177 = dma.done %s170, 2048
        $region36: #{tpu_custom_call.1} parent=31 // pred_fallthru
          _
        // Predicated region
        $region37: #{tpu_custom_call.1} parent=31 // pred_check
          %p178 = pneg %p81
        $region38: #{tpu_custom_call.1} parent=31 // pred_check_branch
          %180 = sbr.rel (%p178) target = $region40
        $region39: #{tpu_custom_call.1} parent=31 // pred_region
          %181 = dma.done [#allocation4], 16
        $region40: #{tpu_custom_call.1} parent=31 // pred_fallthru
          _
        %182 = sfence
        %s183 = sand.u32 %s26, 1
        %s184 = scalar_lea.sflag [#allocation3], %s183
        %s185 = sand.u32 %s26, 1
        %s186 = smul.addr %s185, 128
        %s187 = scalar_lea.vmem [#allocation2], %s186
        %p188 = pneg %p39
        %p189 = pneg %p36
        %p190 = pneg %p60
        %p191 = pneg %p57
        %p192 = pneg %p81
        %p193 = pneg %p78
        %p194 = pneg %p107
        %p195 = pneg %p104
        %s196 = smul.u32 16, %s18
        %p197 = scmp.lt.s32.totalorder %s196, 63
        %s198 = scalar_select %p197, %s196, 63
        %s199 = smul.addr %s198, 4
        %s200 = scalar_lea.vmem %s3, %s199
        %s201 = smul.u32 16, %s18
        %s202 = smul.u32 16, %s18
        %p203 = scmp.lt.s32.totalorder %s202, 63
        %s204 = scalar_select %p203, %s202, 63
        %s205 = smul.addr %s204, 4
        %s206 = scalar_lea.vmem %s3, %s205
        %s207 = smul.u32 16, %s18
        %v209 = vld [vmem:[%s173] sm:$0xff]
        %v210 = vld [vmem:[%s173 + $0x8] sm:$0xff]
        %v211 = vld [vmem:[%s173 + $0x10] sm:$0xff]
        %v212 = vld [vmem:[%s173 + $0x18] sm:$0xff]
        %v213 = vld [vmem:[%s173 + $0x20] sm:$0xff]
        %v214 = vld [vmem:[%s173 + $0x28] sm:$0xff]
        %v215 = vld [vmem:[%s173 + $0x30] sm:$0xff]
        %v216 = vld [vmem:[%s173 + $0x38] sm:$0xff]
        %v217 = vld [vmem:[%s173 + $0x40] sm:$0xff]
        %v218 = vld [vmem:[%s173 + $0x48] sm:$0xff]
        %v219 = vld [vmem:[%s173 + $0x50] sm:$0xff]
        %v220 = vld [vmem:[%s173 + $0x58] sm:$0xff]
        %v221 = vld [vmem:[%s173 + $0x60] sm:$0xff]
        %v222 = vld [vmem:[%s173 + $0x68] sm:$0xff]
        %v223 = vld [vmem:[%s173 + $0x70] sm:$0xff]
        %v224 = vld [vmem:[%s173 + $0x78] sm:$0xff]
        %v225 = vld [vmem:[%s1] sm:$0xf]
        %v226 = vld [vmem:[%s1 + $0x4] sm:$0xf]
        %v227 = vld [vmem:[%s1 + $0x8] sm:$0xf]
        %v228 = vld [vmem:[%s1 + $0xc] sm:$0xf]
        %v229 = vld [vmem:[%s1 + $0x10] sm:$0xf]
        %v230 = vld [vmem:[%s1 + $0x14] sm:$0xf]
        %v231 = vld [vmem:[%s1 + $0x18] sm:$0xf]
        %v232 = vld [vmem:[%s1 + $0x1c] sm:$0xf]
        %v233 = vld [vmem:[%s1 + $0x20] sm:$0xf]
        %v234 = vld [vmem:[%s1 + $0x24] sm:$0xf]
        %v235 = vld [vmem:[%s1 + $0x28] sm:$0xf]
        %v236 = vld [vmem:[%s1 + $0x2c] sm:$0xf]
        %v237 = vld [vmem:[%s1 + $0x30] sm:$0xf]
        %v238 = vld [vmem:[%s1 + $0x34] sm:$0xf]
        %v239 = vld [vmem:[%s1 + $0x38] sm:$0xf]
        %v240 = vld [vmem:[%s1 + $0x3c] sm:$0xf]
        %v241 = vld [vmem:[%s1 + $0x40] sm:$0xf]
        %v242 = vld [vmem:[%s1 + $0x44] sm:$0xf]
        %v243 = vld [vmem:[%s1 + $0x48] sm:$0xf]
        %v244 = vld [vmem:[%s1 + $0x4c] sm:$0xf]
        %v245 = vld [vmem:[%s1 + $0x50] sm:$0xf]
        %v246 = vld [vmem:[%s1 + $0x54] sm:$0xf]
        %v247 = vld [vmem:[%s1 + $0x58] sm:$0xf]
        %v248 = vld [vmem:[%s1 + $0x5c] sm:$0xf]
        %v249 = vld [vmem:[%s1 + $0x60] sm:$0xf]
        %v250 = vld [vmem:[%s1 + $0x64] sm:$0xf]
        %v251 = vld [vmem:[%s1 + $0x68] sm:$0xf]
        %v252 = vld [vmem:[%s1 + $0x6c] sm:$0xf]
        %v253 = vld [vmem:[%s1 + $0x70] sm:$0xf]
        %v254 = vld [vmem:[%s1 + $0x74] sm:$0xf]
        %v255 = vld [vmem:[%s1 + $0x78] sm:$0xf]
        %v256 = vld [vmem:[%s1 + $0x7c] sm:$0xf]
        %v273 = vunpack.c.l.b16 %v209
        %v274 = vunpack.c.h.b16 %v209
        %v275 = vunpack.c.l.b16 %v210
        %v276 = vunpack.c.h.b16 %v210
        %v277 = vunpack.c.l.b16 %v211
        %v278 = vunpack.c.h.b16 %v211
        %v279 = vunpack.c.l.b16 %v212
        %v280 = vunpack.c.h.b16 %v212
        %v281 = vunpack.c.l.b16 %v213
        %v282 = vunpack.c.h.b16 %v213
        %v283 = vunpack.c.l.b16 %v214
        %v284 = vunpack.c.h.b16 %v214
        %v285 = vunpack.c.l.b16 %v215
        %v286 = vunpack.c.h.b16 %v215
        %v287 = vunpack.c.l.b16 %v216
        %v288 = vunpack.c.h.b16 %v216
        %v289 = vunpack.c.l.b16 %v217
        %v290 = vunpack.c.h.b16 %v217
        %v291 = vunpack.c.l.b16 %v218
        %v292 = vunpack.c.h.b16 %v218
        %v293 = vunpack.c.l.b16 %v219
        %v294 = vunpack.c.h.b16 %v219
        %v295 = vunpack.c.l.b16 %v220
        %v296 = vunpack.c.h.b16 %v220
        %v297 = vunpack.c.l.b16 %v221
        %v298 = vunpack.c.h.b16 %v221
        %v299 = vunpack.c.l.b16 %v222
        %v300 = vunpack.c.h.b16 %v222
        %v301 = vunpack.c.l.b16 %v223
        %v302 = vunpack.c.h.b16 %v223
        %v303 = vunpack.c.l.b16 %v224
        %v304 = vunpack.c.h.b16 %v224
        %v305 = vpack.c.b16 %v275, %v273
        %v306 = vpack.c.b16 %v276, %v274
        %v307 = vpack.c.b16 %v279, %v277
        %v308 = vpack.c.b16 %v280, %v278
        %v309 = vpack.c.b16 %v283, %v281
        %v310 = vpack.c.b16 %v284, %v282
        %v311 = vpack.c.b16 %v287, %v285
        %v312 = vpack.c.b16 %v288, %v286
        %v313 = vpack.c.b16 %v291, %v289
        %v314 = vpack.c.b16 %v292, %v290
        %v315 = vpack.c.b16 %v295, %v293
        %v316 = vpack.c.b16 %v296, %v294
        %v317 = vpack.c.b16 %v299, %v297
        %v318 = vpack.c.b16 %v300, %v298
        %v319 = vpack.c.b16 %v303, %v301
        %v320 = vpack.c.b16 %v304, %v302
        %v369 = vunpack.c.l.b16 %v225
        %v370 = vunpack.c.l.b16 %v226
        %v371 = vunpack.c.l.b16 %v227
        %v372 = vunpack.c.l.b16 %v228
        %v373 = vunpack.c.l.b16 %v229
        %v374 = vunpack.c.l.b16 %v230
        %v375 = vunpack.c.l.b16 %v231
        %v376 = vunpack.c.l.b16 %v232
        %v377 = vunpack.c.l.b16 %v233
        %v378 = vunpack.c.l.b16 %v234
        %v379 = vunpack.c.l.b16 %v235
        %v380 = vunpack.c.l.b16 %v236
        %v381 = vunpack.c.l.b16 %v237
        %v382 = vunpack.c.l.b16 %v238
        %v383 = vunpack.c.l.b16 %v239
        %v384 = vunpack.c.l.b16 %v240
        %v385 = vunpack.c.l.b16 %v241
        %v386 = vunpack.c.l.b16 %v242
        %v387 = vunpack.c.l.b16 %v243
        %v388 = vunpack.c.l.b16 %v244
        %v389 = vunpack.c.l.b16 %v245
        %v390 = vunpack.c.l.b16 %v246
        %v391 = vunpack.c.l.b16 %v247
        %v392 = vunpack.c.l.b16 %v248
        %v393 = vunpack.c.l.b16 %v249
        %v394 = vunpack.c.l.b16 %v250
        %v395 = vunpack.c.l.b16 %v251
        %v396 = vunpack.c.l.b16 %v252
        %v397 = vunpack.c.l.b16 %v253
        %v398 = vunpack.c.l.b16 %v254
        %v399 = vunpack.c.l.b16 %v255
        %v400 = vunpack.c.l.b16 %v256
        %v401 = vpack.c.b16 %v370, %v369
        %v402 = vpack.c.b16 %v372, %v371
        %v403 = vpack.c.b16 %v374, %v373
        %v404 = vpack.c.b16 %v376, %v375
        %v405 = vpack.c.b16 %v378, %v377
        %v406 = vpack.c.b16 %v380, %v379
        %v407 = vpack.c.b16 %v382, %v381
        %v408 = vpack.c.b16 %v384, %v383
        %v409 = vpack.c.b16 %v386, %v385
        %v410 = vpack.c.b16 %v388, %v387
        %v411 = vpack.c.b16 %v390, %v389
        %v412 = vpack.c.b16 %v392, %v391
        %v413 = vpack.c.b16 %v394, %v393
        %v414 = vpack.c.b16 %v396, %v395
        %v415 = vpack.c.b16 %v398, %v397
        %v416 = vpack.c.b16 %v400, %v399
        %433 = vmatprep.subr.bf16.mxu0 0
        %434 = vmatpush1.bf16.msra.mxu0 %v401
        %435 = vmatprep.subr.bf16.mxu0 0
        %436 = vmatpush1.bf16.msra.mxu0 %v402
        %437 = vmatprep.subr.bf16.mxu0 0
        %438 = vmatpush1.bf16.msra.mxu0 %v403
        %439 = vmatprep.subr.bf16.mxu0 0
        %440 = vmatpush1.bf16.msra.mxu0 %v404
        %441 = vmatprep.subr.bf16.mxu0 0
        %442 = vmatpush1.bf16.msra.mxu0 %v405
        %443 = vmatprep.subr.bf16.mxu0 0
        %444 = vmatpush1.bf16.msra.mxu0 %v406
        %445 = vmatprep.subr.bf16.mxu0 0
        %446 = vmatpush1.bf16.msra.mxu0 %v407
        %447 = vmatprep.subr.bf16.mxu0 0
        %448 = vmatpush1.bf16.msra.mxu0 %v408
        %449 = vmatprep.subr.bf16.mxu0 0
        %450 = vmatpush1.bf16.msra.mxu0 %v409
        %451 = vmatprep.subr.bf16.mxu0 0
        %452 = vmatpush1.bf16.msra.mxu0 %v410
        %453 = vmatprep.subr.bf16.mxu0 0
        %454 = vmatpush1.bf16.msra.mxu0 %v411
        %455 = vmatprep.subr.bf16.mxu0 0
        %456 = vmatpush1.bf16.msra.mxu0 %v412
        %457 = vmatprep.subr.bf16.mxu0 0
        %458 = vmatpush1.bf16.msra.mxu0 %v413
        %459 = vmatprep.subr.bf16.mxu0 0
        %460 = vmatpush1.bf16.msra.mxu0 %v414
        %461 = vmatprep.subr.bf16.mxu0 0
        %462 = vmatpush1.bf16.msra.mxu0 %v415
        %463 = vmatprep.subr.bf16.mxu0 0
        %464 = vmatpush1.bf16.msra.mxu0 %v416
        %465 = vmatprep.mubr.bf16.mxu0 %v306
        %466 = vmatmul.mubr.bf16.gmra.mrb[0].mxu0 %v305
        %v467 = vpop.f32.mrb[0].mxu0
        %v468 = vadd.f32 0.0, %v467
        %v469 = vpop.f32.mrb[0].mxu0
        %v470 = vpop.f32.mrb[0].mxu0
        %v471 = vadd.f32 0.0, %v470
        %v472 = vpop.f32.mrb[0].mxu0
        %473 = vmatprep.mubr.bf16.mxu0 %v308
        %474 = vmatmul.mubr.bf16.gmra.mrb[0].mxu0 %v307
        %v475 = vpop.f32.mrb[0].mxu0
        %v476 = vadd.f32 0.0, %v475
        %v477 = vpop.f32.mrb[0].mxu0
        %v478 = vpop.f32.mrb[0].mxu0
        %v479 = vadd.f32 0.0, %v478
        %v480 = vpop.f32.mrb[0].mxu0
        %481 = vmatprep.mubr.bf16.mxu0 %v310
        %482 = vmatmul.mubr.bf16.gmra.mrb[0].mxu0 %v309
        %v483 = vpop.f32.mrb[0].mxu0
        %v484 = vadd.f32 0.0, %v483
        %v485 = vpop.f32.mrb[0].mxu0
        %v486 = vpop.f32.mrb[0].mxu0
        %v487 = vadd.f32 0.0, %v486
        %v488 = vpop.f32.mrb[0].mxu0
        %489 = vmatprep.mubr.bf16.mxu0 %v312
        %490 = vmatmul.mubr.bf16.gmra.mrb[0].mxu0 %v311
        %v491 = vpop.f32.mrb[0].mxu0
        %v492 = vadd.f32 0.0, %v491
        %v493 = vpop.f32.mrb[0].mxu0
        %v494 = vpop.f32.mrb[0].mxu0
        %v495 = vadd.f32 0.0, %v494
        %v496 = vpop.f32.mrb[0].mxu0
        %497 = vmatprep.mubr.bf16.mxu0 %v314
        %498 = vmatmul.mubr.bf16.gmra.mrb[0].mxu0 %v313
        %v499 = vpop.f32.mrb[0].mxu0
        %v500 = vadd.f32 0.0, %v499
        %v501 = vpop.f32.mrb[0].mxu0
        %v502 = vpop.f32.mrb[0].mxu0
        %v503 = vadd.f32 0.0, %v502
        %v504 = vpop.f32.mrb[0].mxu0
        %505 = vmatprep.mubr.bf16.mxu0 %v316
        %506 = vmatmul.mubr.bf16.gmra.mrb[0].mxu0 %v315
        %v507 = vpop.f32.mrb[0].mxu0
        %v508 = vadd.f32 0.0, %v507
        %v509 = vpop.f32.mrb[0].mxu0
        %v510 = vpop.f32.mrb[0].mxu0
        %v511 = vadd.f32 0.0, %v510
        %v512 = vpop.f32.mrb[0].mxu0
        %513 = vmatprep.mubr.bf16.mxu0 %v318
        %514 = vmatmul.mubr.bf16.gmra.mrb[0].mxu0 %v317
        %v515 = vpop.f32.mrb[0].mxu0
        %v516 = vadd.f32 0.0, %v515
        %v517 = vpop.f32.mrb[0].mxu0
        %v518 = vpop.f32.mrb[0].mxu0
        %v519 = vadd.f32 0.0, %v518
        %v520 = vpop.f32.mrb[0].mxu0
        %521 = vmatprep.mubr.bf16.mxu0 %v320
        %522 = vmatmul.mubr.bf16.gmra.mrb[0].mxu0 %v319
        %v523 = vpop.f32.mrb[0].mxu0
        %v524 = vadd.f32 0.0, %v523
        %v525 = vpop.f32.mrb[0].mxu0
        %v526 = vpop.f32.mrb[0].mxu0
        %v527 = vadd.f32 0.0, %v526
        %v528 = vpop.f32.mrb[0].mxu0
        %529 = vdwg.mxu0
        %s530 = sld [smem:[#allocation5]]
        %v531 = vstv %s530
        %v532 = vmul.f32 %v468, %v531
        %v533 = vmul.f32 %v471, %v531
        %v534 = vmul.f32 %v476, %v531
        %v535 = vmul.f32 %v479, %v531
        %v536 = vmul.f32 %v484, %v531
        %v537 = vmul.f32 %v487, %v531
        %v538 = vmul.f32 %v492, %v531
        %v539 = vmul.f32 %v495, %v531
        %v540 = vmul.f32 %v500, %v531
        %v541 = vmul.f32 %v503, %v531
        %v542 = vmul.f32 %v508, %v531
        %v543 = vmul.f32 %v511, %v531
        %v544 = vmul.f32 %v516, %v531
        %v545 = vmul.f32 %v519, %v531
        %v546 = vmul.f32 %v524, %v531
        %v547 = vmul.f32 %v527, %v531
        %s548 = sld [smem:[#allocation5 + $0x1]]
        %v549 = vstv %s548
        %v550 = vadd.f32 %v532, %v549
        %v551 = vadd.f32 %v533, %v549
        %v552 = vadd.f32 %v534, %v549
        %v553 = vadd.f32 %v535, %v549
        %v554 = vadd.f32 %v536, %v549
        %v555 = vadd.f32 %v537, %v549
        %v556 = vadd.f32 %v538, %v549
        %v557 = vadd.f32 %v539, %v549
        %v558 = vadd.f32 %v540, %v549
        %v559 = vadd.f32 %v541, %v549
        %v560 = vadd.f32 %v542, %v549
        %v561 = vadd.f32 %v543, %v549
        %v562 = vadd.f32 %v544, %v549
        %v563 = vadd.f32 %v545, %v549
        %v564 = vadd.f32 %v546, %v549
        %v565 = vadd.f32 %v547, %v549
        %v566 = vmax.f32 %v550, 0.0
        %v567 = vmax.f32 %v551, 0.0
        %v568 = vmax.f32 %v552, 0.0
        %v569 = vmax.f32 %v553, 0.0
        %v570 = vmax.f32 %v554, 0.0
        %v571 = vmax.f32 %v555, 0.0
        %v572 = vmax.f32 %v556, 0.0
        %v573 = vmax.f32 %v557, 0.0
        %v574 = vmax.f32 %v558, 0.0
        %v575 = vmax.f32 %v559, 0.0
        %v576 = vmax.f32 %v560, 0.0
        %v577 = vmax.f32 %v561, 0.0
        %v578 = vmax.f32 %v562, 0.0
        %v579 = vmax.f32 %v563, 0.0
        %v580 = vmax.f32 %v564, 0.0
        %v581 = vmax.f32 %v565, 0.0
        %s582 = sld [smem:[#allocation5 + $0x2]]
        %v583 = vstv %s582
        %v584 = vadd.f32 %v566, %v583
        %v585 = vadd.f32 %v567, %v583
        %v586 = vadd.f32 %v568, %v583
        %v587 = vadd.f32 %v569, %v583
        %v588 = vadd.f32 %v570, %v583
        %v589 = vadd.f32 %v571, %v583
        %v590 = vadd.f32 %v572, %v583
        %v591 = vadd.f32 %v573, %v583
        %v592 = vadd.f32 %v574, %v583
        %v593 = vadd.f32 %v575, %v583
        %v594 = vadd.f32 %v576, %v583
        %v595 = vadd.f32 %v577, %v583
        %v596 = vadd.f32 %v578, %v583
        %v597 = vadd.f32 %v579, %v583
        %v598 = vadd.f32 %v580, %v583
        %v599 = vadd.f32 %v581, %v583
        %v600 = vpack.c.bf16 %v585, %v584
        %v601 = vpack.c.bf16 %v587, %v586
        %v602 = vpack.c.bf16 %v589, %v588
        %v603 = vpack.c.bf16 %v591, %v590
        %v604 = vpack.c.bf16 %v593, %v592
        %v605 = vpack.c.bf16 %v595, %v594
        %v606 = vpack.c.bf16 %v597, %v596
        %v607 = vpack.c.bf16 %v599, %v598
        %v616 = vunpack.c.l.b16 %v600
        %v617 = vunpack.c.h.b16 %v600
        %v618 = vunpack.c.l.b16 %v601
        %v619 = vunpack.c.h.b16 %v601
        %v620 = vunpack.c.l.b16 %v602
        %v621 = vunpack.c.h.b16 %v602
        %v622 = vunpack.c.l.b16 %v603
        %v623 = vunpack.c.h.b16 %v603
        %v624 = vunpack.c.l.b16 %v604
        %v625 = vunpack.c.h.b16 %v604
        %v626 = vunpack.c.l.b16 %v605
        %v627 = vunpack.c.h.b16 %v605
        %v628 = vunpack.c.l.b16 %v606
        %v629 = vunpack.c.h.b16 %v606
        %v630 = vunpack.c.l.b16 %v607
        %v631 = vunpack.c.h.b16 %v607
        %v632 = vpack.c.b16 %v616, %v616
        %v633 = vpack.c.b16 %v617, %v617
        %v634 = vpack.c.b16 %v618, %v618
        %v635 = vpack.c.b16 %v619, %v619
        %v636 = vpack.c.b16 %v620, %v620
        %v637 = vpack.c.b16 %v621, %v621
        %v638 = vpack.c.b16 %v622, %v622
        %v639 = vpack.c.b16 %v623, %v623
        %v640 = vpack.c.b16 %v624, %v624
        %v641 = vpack.c.b16 %v625, %v625
        %v642 = vpack.c.b16 %v626, %v626
        %v643 = vpack.c.b16 %v627, %v627
        %v644 = vpack.c.b16 %v628, %v628
        %v645 = vpack.c.b16 %v629, %v629
        %v646 = vpack.c.b16 %v630, %v630
        %v647 = vpack.c.b16 %v631, %v631
        %vm664 = vcmask 519168
        %665 = vst.msk [vmem:[%s206] sm:$0xf] %vm664, %v632
        %666 = vst.msk [vmem:[%s206 + $0x4] sm:$0xf] %vm664, %v633
        %667 = vst.msk [vmem:[%s206 + $0x8] sm:$0xf] %vm664, %v634
        %668 = vst.msk [vmem:[%s206 + $0xc] sm:$0xf] %vm664, %v635
        %669 = vst.msk [vmem:[%s206 + $0x10] sm:$0xf] %vm664, %v636
        %670 = vst.msk [vmem:[%s206 + $0x14] sm:$0xf] %vm664, %v637
        %671 = vst.msk [vmem:[%s206 + $0x18] sm:$0xf] %vm664, %v638
        %672 = vst.msk [vmem:[%s206 + $0x1c] sm:$0xf] %vm664, %v639
        %673 = vst.msk [vmem:[%s206 + $0x20] sm:$0xf] %vm664, %v640
        %674 = vst.msk [vmem:[%s206 + $0x24] sm:$0xf] %vm664, %v641
        %675 = vst.msk [vmem:[%s206 + $0x28] sm:$0xf] %vm664, %v642
        %676 = vst.msk [vmem:[%s206 + $0x2c] sm:$0xf] %vm664, %v643
        %677 = vst.msk [vmem:[%s206 + $0x30] sm:$0xf] %vm664, %v644
        %678 = vst.msk [vmem:[%s206 + $0x34] sm:$0xf] %vm664, %v645
        %679 = vst.msk [vmem:[%s206 + $0x38] sm:$0xf] %vm664, %v646
        %680 = vst.msk [vmem:[%s206 + $0x3c] sm:$0xf] %vm664, %v647
        %s681 = smul.u32 16, %s18
        %p682 = scmp.lt.s32.totalorder %s681, 63
        %s683 = scalar_select %p682, %s681, 63
        %s684 = smul.addr %s683, 4
        %s685 = scalar_lea.vmem %s3, %s684
        // Predicated region
        $region41: #{tpu_custom_call.1} parent=31 // pred_check
          %p686 = pneg %p104
        $region42: #{tpu_custom_call.1} parent=31 // pred_check_branch
          %688 = sbr.rel (%p686) target = $region44
        $region43: #{tpu_custom_call.1} parent=31 // pred_region
          %s689 = smul.u32 16, %s18
        $region44: #{tpu_custom_call.1} parent=31 // pred_fallthru
          _
      $region32: #{tpu_custom_call.1} parent=5 // pred_fallthru
        _
      %p690 = scmp.le.s32.totalorder 2, %s13
      // Predicated region
      $region45: #{tpu_custom_call.1} parent=5 // pred_check
        %p691 = pneg %p690
      $region46: #{tpu_custom_call.1} parent=5 // pred_check_branch
        %693 = sbr.rel (%p691) target = $region48
      $region47: #{tpu_custom_call.1} parent=5 // pred_region
        %s694 = ssub.s32 %s13, 2
        // Predicated region
        $region49: #{tpu_custom_call.1} parent=47 // pred_check
          %p695 = pneg %p110
        $region50: #{tpu_custom_call.1} parent=47 // pred_check_branch
          %697 = sbr.rel (%p695) target = $region52
        $region51: #{tpu_custom_call.1} parent=47 // pred_region
          %s698 = smul.u32 16, %s19
          %p699 = scmp.lt.s32.totalorder %s698, 63
          %s700 = scalar_select %p699, %s698, 63
          %s701 = smul.addr %s700, 4
          %s702 = scalar_lea.vmem %s3, %s701
        $region52: #{tpu_custom_call.1} parent=47 // pred_fallthru
          _
      $region48: #{tpu_custom_call.1} parent=5 // pred_fallthru
        _
    $region6: #{tpu_custom_call.1} parent=1 // loop_footer
      %s17 = sadd.s32 1, %s13
    $region7: #{tpu_custom_call.1} parent=1 // loop_footer_branch
      %12 = sbr.rel target = $region3
    $region8: #{tpu_custom_call.1} parent=1 // loop_exit
      _
    %703 = vsyncpa [#allocation3], 1
    %s704 = scalar_lea.sflag [#allocation3], 1
    %705 = vsyncpa %s704, 1
    %706 = vsyncpa [#allocation4], 1
    %s707 = scalar_lea.sflag [#allocation4], 1
    %708 = vsyncpa %s707, 1

</llo_original>
